<compile_context>
chip_gen: v7x
topology: tpu7x:2x2x1
jax: 0.10.0
libtpu: 0.0.40
codegen_flags: <defaults>
</compile_context>

<pallas_src>
import jax
import jax.numpy as jnp
from jax.experimental import pallas as pl
from jax.experimental.pallas import tpu as pltpu


def _identity_kernel(x_ref, o_ref):
    # forward(x) = x  ->  pure VMEM tile copy
    o_ref[...] = x_ref[...]


_BLOCK_BYTES_BUDGET = 8 * 1024 * 1024       # dense bytes per block
_VMEM_LIMIT_BYTES = 48 * 1024 * 1024        # headroom over 2x double-buffered in+out
_TARGET_GRID_STEPS = 8                      # enough steps to feed both v7x TCs
_MIN_SPLIT_BLOCK_BYTES = 1 * 1024 * 1024    # don't shrink blocks below this for step count
_LANE_WIDTHS = (2048, 1024, 512, 256, 128)  # lane-dense candidate widths (multiples of 128)


def _sublane_multiple(dtype):
    itemsize = jnp.dtype(dtype).itemsize
    # f32/i32 -> 8, bf16/f16 -> 16, int8/fp8 -> 32 sublane packing.
    return max(8, 32 // itemsize)


def _identity_copy_pallas(x):
    """Bit-exact identity copy of x through a lane-dense Pallas kernel."""
    n = x.size
    if n == 0:
        return x

    if n % 128 != 0 or n < 128:
        # A dense lane-aligned view is impossible without padding (an extra
        # full-array HBM pass).  Forward is identity, so skip the copy.
        # TODO(synk): add a masked 1D tail path if a ragged copy kernel is ever required.
        return x

    # Pick the widest lane-dense width that still gives >= 8 rows (full
    # sublanes); otherwise the widest that divides the element count.
    width = None
    for w in _LANE_WIDTHS:
        if n % w == 0 and n // w >= 8:
            width = w
            break
    if width is None:
        for w in _LANE_WIDTHS:
            if n % w == 0:
                width = w
                break

    rows = n // width
    dtype = x.dtype
    itemsize = jnp.dtype(dtype).itemsize
    row_bytes = width * itemsize
    smult = _sublane_multiple(dtype)

    # Rows per block from the dense VMEM budget, rounded to a sublane multiple.
    rows_per_budget = max(1, _BLOCK_BYTES_BUDGET // row_bytes)
    rows_per_budget = max(smult, (rows_per_budget // smult) * smult)
    block_rows = min(rows, rows_per_budget)

    # For large copies, cap block size so the grid has >= ~8 steps (megacore
    # sharding / DMA overlap), but never below ~1 MiB per block.
    rows_per_target = -(-rows // _TARGET_GRID_STEPS)                 # cdiv
    rows_per_target = max(smult, -(-rows_per_target // smult) * smult)
    if rows_per_target * row_bytes >= _MIN_SPLIT_BLOCK_BYTES:
        block_rows = min(block_rows, rows_per_target)

    grid = (pl.cdiv(rows, block_rows),)
    x2d = x.reshape(rows, width)

    out2d = pl.pallas_call(
        _identity_kernel,
        out_shape=jax.ShapeDtypeStruct((rows, width), dtype),
        grid_spec=pltpu.PrefetchScalarGridSpec(
            num_scalar_prefetch=0,
            grid=grid,
            in_specs=[pl.BlockSpec((block_rows, width), lambda i: (i, 0))],
            out_specs=pl.BlockSpec((block_rows, width), lambda i: (i, 0)),
        ),
        compiler_params=pltpu.CompilerParams(
            dimension_semantics=("parallel",),
            vmem_limit_bytes=_VMEM_LIMIT_BYTES,
        ),
    )(x2d)

    return out2d.reshape(x.shape)


def basic_function_forward(x, *, use_pallas=False):
    """BasicFunction.forward: identity.

    Default path returns x (zero HBM traffic — the dominant optimization for
    an identity op).  `use_pallas=True` routes through the Pallas copy kernel
    for API parity / benchmarking.
    """
    if not use_pallas:
        return x
    return _identity_copy_pallas(x)


class BasicFunctionPallas:
    """JAX/Pallas counterpart of BasicFunction.

    kwargs follow the PyTorch module's convention:
      P_a=[...] or None, FixedP_a=True/False, ...
    Parameters with value None are initialized uniform [0,1) (torch.rand
    semantics).  Forward is identity; the parameters never enter it.
    """

    def __init__(self, input_shape, key=None, use_pallas=False, **kwargs):
        import re
        if key is None:
            key = jax.random.PRNGKey(0)
        self.use_pallas = use_pallas
        value_dict = {}
        fixed_dict = {}
        for k, v in kwargs.items():
            m = re.match('Fixed(.*)', k)
            if m:
                fixed_dict[m.group(1)] = v
            else:
                value_dict[k] = v
                if k not in fixed_dict:
                    fixed_dict[k] = False
        self.params = {}
        for k in value_dict:
            key, sub = jax.random.split(key)
            val = (jax.random.uniform(sub, tuple(input_shape), jnp.float32)
                   if value_dict[k] is None else jnp.asarray(value_dict[k]))
            # Fixed vs trainable is metadata only; forward ignores params.
            self.params['para_' + k] = (val, bool(fixed_dict[k]))

    def __call__(self, x):
        return basic_function_forward(x, use_pallas=self.use_pallas)


if __name__ == "__main__":
    key = jax.random.PRNGKey(0)
    key, kx = jax.random.split(key)

    # Small NCHW input consistent with a fuzzy-membership-function module.
    x = jax.random.normal(kx, (2, 4, 16, 16), dtype=jnp.float32)

    module = BasicFunctionPallas(
        input_shape=(2, 4, 16, 16),
        key=key,
        use_pallas=True,          # exercise the Pallas kernel in this test
        P_a=None,
        P_b=jnp.ones((2, 4, 16, 16), jnp.float32),
        FixedP_b=True,
    )

    # Kernel path (lane-dense copy) — must be bit-exact identity.
    y = module(x)
    y = jax.block_until_ready(y)
    assert y.shape == x.shape and y.dtype == x.dtype
    assert bool(jnp.all(y == x))

    # Default fast path (no kernel launch) — also identity.
    y_fast = basic_function_forward(x)
    assert y_fast is x or bool(jnp.all(y_fast == x))

    print("KERNEL_OK")
</pallas_src>

<mosaic_0001>
module attributes {stable_mosaic.version = 11 : i64} {
  func.func @_identity_kernel(%arg0: i32, %arg1: memref<8x256xf32, #tpu.memory_space<vmem>>, %arg2: memref<8x256xf32, #tpu.memory_space<vmem>>) attributes {dimension_semantics = [#tpu.dimension_semantics<parallel>], iteration_bounds = array<i64: 1>, scalar_prefetch = 0 : i64, scratch_operands = 0 : i64, tpu.core_type = #tpu.core_type<tc>, window_params = [{transform_indices = @transform_0, window_bounds = array<i64: 8, 256>}, {transform_indices = @transform_1, window_bounds = array<i64: 8, 256>}]} {
    %c0 = arith.constant 0 : index
    %c0_0 = arith.constant 0 : index
    %0 = vector.load %arg1[%c0, %c0_0] : memref<8x256xf32, #tpu.memory_space<vmem>>, vector<8x256xf32>
    %c0_1 = arith.constant 0 : index
    %c0_2 = arith.constant 0 : index
    %1 = vector.load %arg2[%c0_1, %c0_2] : memref<8x256xf32, #tpu.memory_space<vmem>>, vector<8x256xf32>
    tpu.vector_store %arg2[%c0_1, %c0_2], %0 {strides = array<i32>} : memref<8x256xf32, #tpu.memory_space<vmem>>, vector<8x256xf32>,
    return
  }
  func.func @transform_0(%arg0: i32) -> (i32, i32) {
    %c0_i32 = arith.constant 0 : i32
    %c0_i32_0 = arith.constant 0 : i32
    return %arg0, %c0_i32 : i32, i32
  }
  func.func @transform_1(%arg0: i32) -> (i32, i32) {
    %c0_i32 = arith.constant 0 : i32
    %c0_i32_0 = arith.constant 0 : i32
    return %arg0, %c0_i32 : i32, i32
  }
}

</mosaic_0001>

<llo_original>
// kernel: tpu_custom_call.1
$region0: #{tpu_custom_call.1}
  #allocation0 [shape = 'u32[]', space=smem, size = 0x4, offset = 0x4, fixed_abs, tag = 'smem constant byte address 0x4 - core index']
  #allocation1 [shape = 'u32[144,128]{1,0:T(1,128)}', space=vmem, size = 0x12000, scoped, tag = 'internal scratch']
  %s0 = inlined_call_operand.hbm [shape: f32[8,256], index: 0, kind: input, shape index: {}]
  %s1 = inlined_call_operand.hbm [shape: f32[8,256], index: 1, kind: output, shape index: {}]
  %s2 = sld [smem:[#allocation0]]
  $region18: #{tpu_custom_call.1} parent=0
    _
  %s4 = ssub.s32 1, %s2
  %s5 = scalar_select 0, %s4, %s2
  $region1: #{tpu_custom_call.1} parent=0
    #allocation2 [shape = 'u8[8192]{0}', space=vmem, size = 0x2000, scoped, tag = 'input window, operand 0, single buffered']
    #allocation3 [shape = 's32[1]{0}', space=sflag, size = 0x4, scoped, tag = 'scoped memory for tpu_custom_call.1']
    #allocation4 [shape = 's32[1]{0}', space=sflag, size = 0x4, scoped, tag = 'scoped memory for tpu_custom_call.1']
    #allocation5 [shape = 'u8[8192]{0}', space=vmem, size = 0x2000, scoped, tag = 'output window, operand 0, single buffered']
    %6 = vsyncpa [#allocation3], 0
    %7 = vsyncpa [#allocation4], 0
    // Predicated region
    $region2: #{tpu_custom_call.1} parent=1 // pred_check
      _
    $region3: #{tpu_custom_call.1} parent=1 // pred_check_branch
      %9 = sbr.rel (0) target = $region5
    $region4: #{tpu_custom_call.1} parent=1 // pred_region
      %s11 = ssub.s32 256, 256
      %12 = vsyncadd [#allocation3], %s11
      %s14 = sshll.u32 [#allocation2], 4
      %s15 = int_to_ptr.vmem [resolvable:$true] %s14
      %17 = dma.hbm_to_vmem [thread:$0]  %s0, 256, %s15, [#allocation3]
    $region5: #{tpu_custom_call.1} parent=1 // pred_fallthru
      _
    // Predicated region
    $region6: #{tpu_custom_call.1} parent=1 // pred_check
      _
    $region7: #{tpu_custom_call.1} parent=1 // pred_check_branch
      %19 = sbr.rel (0) target = $region9
    $region8: #{tpu_custom_call.1} parent=1 // pred_region
      %20 = dma.done [#allocation3], 256
    $region9: #{tpu_custom_call.1} parent=1 // pred_fallthru
      _
    %v21 = vld [vmem:[#allocation2] sm:$0xff]
    %v22 = vld [vmem:[#allocation2 + $0x8] sm:$0xff]
    %23 = vst [vmem:[#allocation5] sm:$0xff] %v21
    %24 = vst [vmem:[#allocation5 + $0x8] sm:$0xff] %v22
    // Predicated region
    $region10: #{tpu_custom_call.1} parent=1 // pred_check
      _
    $region11: #{tpu_custom_call.1} parent=1 // pred_check_branch
      %26 = sbr.rel (0) target = $region13
    $region12: #{tpu_custom_call.1} parent=1 // pred_region
      %s28 = ssub.s32 256, 256
      %29 = vsyncadd [#allocation4], %s28
      %s31 = sshll.u32 [#allocation5], 4
      %s32 = int_to_ptr.vmem [resolvable:$true] %s31
      %34 = dma.vmem_to_hbm [thread:$0]  %s32, 256, %s1, [#allocation4]
    $region13: #{tpu_custom_call.1} parent=1 // pred_fallthru
      _
    // Predicated region
    $region14: #{tpu_custom_call.1} parent=1 // pred_check
      _
    $region15: #{tpu_custom_call.1} parent=1 // pred_check_branch
      %36 = sbr.rel (0) target = $region17
    $region16: #{tpu_custom_call.1} parent=1 // pred_region
      %37 = dma.done [#allocation4], 256
    $region17: #{tpu_custom_call.1} parent=1 // pred_fallthru
      _
    %38 = vsyncpa [#allocation3], 1
    %39 = vsyncpa [#allocation4], 1

</llo_original>
